<compile_context>
chip_gen: v7x
topology: tpu7x:2x2x1
jax: 0.10.0
libtpu: 0.0.40
codegen_flags: <defaults>
</compile_context>

<pallas_src>
import functools

import jax
import jax.numpy as jnp
from jax import lax
from jax.experimental import pallas as pl
from jax.experimental.pallas import tpu as pltpu

ALPHA = 1.0
GAMMA = 2.0


def _focal_loss_kernel(n_ref, x_ref, t_ref, o_ref, *, alpha, gamma, block_n):
    i = pl.program_id(0)
    n_valid = n_ref[0]                                       # SMEM scalar

    logits = x_ref[...].astype(jnp.float32)                  # (tb, C)
    tb, c = logits.shape
    tgt = t_ref[...]                                          # (tb, 1) int32

    # Fused one-hot: masked sum instead of materializing a f32 one-hot + mul.
    col_ids = lax.broadcasted_iota(jnp.int32, (tb, c), 1)
    target_logit = jnp.sum(jnp.where(col_ids == tgt, logits, 0.0),
                           axis=-1, keepdims=True)            # (tb, 1)

    # Numerically-stable log-sum-exp; exp(logits - m) reused for the row sum.
    m = jnp.max(logits, axis=-1, keepdims=True)               # (tb, 1)
    e = jnp.exp(logits - m)                                   # (tb, C)
    sum_e = jnp.sum(e, axis=-1, keepdims=True)                # (tb, 1)
    lse = m + jnp.log(sum_e)                                  # (tb, 1)

    ce = lse - target_logit                                   # per-sample CE
    pt = jnp.exp(-ce)                                         # narrow (tb,1) EUP
    one_minus_pt = 1.0 - pt

    g = float(gamma)
    if g == 2.0:
        w = jnp.square(one_minus_pt)                          # VPU mul, no pow
    elif g == int(g) and g >= 0.0:
        w = jnp.ones_like(one_minus_pt)
        for _ in range(int(g)):
            w = w * one_minus_pt
    else:
        w = one_minus_pt ** g

    focal = w * ce
    if float(alpha) != 1.0:
        focal = focal * jnp.float32(alpha)

    # Mask rows past the true N (partial trailing block: garbage rows -> 0;
    # select does not propagate NaN/inf from the unselected branch).
    row_ids = lax.broadcasted_iota(jnp.int32, (tb, 1), 0) + i * block_n
    focal = jnp.where(row_ids < n_valid, focal, 0.0)

    o_ref[0, 0] = jnp.sum(focal)                              # per-block partial


def _choose_block_n(n, c, in_itemsize, *, sublane=8,
                    tile_budget_bytes=2 * 1024 * 1024, max_rows=4096):
    """Largest row tile (multiple of the dtype sublane) within the VMEM budget.

    Budget accounts for lane padding (rows are padded to 128 lanes in VMEM) and
    for the f32 temporaries inside the kernel, so total footprint stays far
    below the 16/32 MiB scoped-VMEM defaults (and v7x's 64 MiB physical).
    """
    c_lanes = ((c + 127) // 128) * 128
    bytes_per_row = c_lanes * max(in_itemsize, 4)
    rows = tile_budget_bytes // max(1, bytes_per_row)
    rows = max(sublane, min(max_rows, rows))
    rows -= rows % sublane
    n_pad = ((n + sublane - 1) // sublane) * sublane
    return max(sublane, min(rows, n_pad))


def focal_loss(logits, targets, *, alpha=ALPHA, gamma=GAMMA,
               reduction="mean", block_n=None):
    """logits: (N, C) float32/bfloat16; targets: (N,) int. Returns scalar loss."""
    n, c = logits.shape
    in_itemsize = jnp.dtype(logits.dtype).itemsize
    sublane = 32 // max(1, in_itemsize)          # 8 f32, 16 bf16, 32 int8/fp8
    if block_n is None:
        block_n = _choose_block_n(n, c, in_itemsize, sublane=sublane)
    assert block_n % sublane == 0, (block_n, sublane)

    num_blocks = pl.cdiv(n, block_n)
    targets_2d = targets.astype(jnp.int32).reshape(n, 1)
    n_valid = jnp.array([n], dtype=jnp.int32)

    kernel = functools.partial(
        _focal_loss_kernel, alpha=float(alpha), gamma=float(gamma),
        block_n=block_n)

    partial_sums = pl.pallas_call(
        kernel,
        out_shape=jax.ShapeDtypeStruct((num_blocks, 1), jnp.float32),
        grid_spec=pltpu.PrefetchScalarGridSpec(
            num_scalar_prefetch=1,            # n_valid -> SMEM
            grid=(num_blocks,),
            in_specs=[
                # streamed logits row-tiles (double-buffered by Pallas)
                pl.BlockSpec((block_n, c), lambda i, n_ref: (i, 0)),
                # streamed targets row-tiles (tiny, pipelines for free)
                pl.BlockSpec((block_n, 1), lambda i, n_ref: (i, 0)),
            ],
            # per-block scalar partial sum; final reduce happens in the wrapper
            out_specs=pl.BlockSpec((1, 1), lambda i, n_ref: (i, 0),
                                   memory_space=pltpu.SMEM),
        ),
        compiler_params=pltpu.CompilerParams(
            dimension_semantics=("parallel",),
            vmem_limit_bytes=32 * 1024 * 1024,
        ),
    )(n_valid, logits, targets_2d)

    total = jnp.sum(partial_sums)
    if reduction == "mean":
        return total / jnp.float32(n)
    if reduction == "sum":
        return total
    # TODO(synk): reduction='none' (per-sample tensor output) not implemented.
    raise NotImplementedError("reduction must be 'mean' or 'sum'")


def _focal_loss_ref(logits, targets, alpha=ALPHA, gamma=GAMMA, reduction="mean"):
    # pure-JAX reference of F.cross_entropy(reduction='none') + focal weighting
    logp = jax.nn.log_softmax(logits.astype(jnp.float32), axis=-1)
    ce = -jnp.take_along_axis(logp, targets[:, None].astype(jnp.int32), axis=-1)[:, 0]
    pt = jnp.exp(-ce)
    fl = alpha * (1.0 - pt) ** gamma * ce
    return jnp.mean(fl) if reduction == "mean" else jnp.sum(fl)


if __name__ == "__main__":
    key = jax.random.PRNGKey(0)
    k1, k2, k3, k4, k5, k6 = jax.random.split(key, 6)

    # Case 1: small (N, C) f32 batch, auto tile (single block).
    N, C = 32, 16
    logits = jax.random.normal(k1, (N, C), dtype=jnp.float32)
    targets = jax.random.randint(k2, (N,), 0, C, dtype=jnp.int32)
    loss = jax.block_until_ready(focal_loss(logits, targets))
    ref = _focal_loss_ref(logits, targets)
    assert jnp.allclose(loss, ref, rtol=1e-5, atol=1e-6), (loss, ref)

    # Case 2: ragged N with a multi-block 'parallel' grid and a partial trailing
    # block (exercises the no-pad path, streamed targets and the row mask).
    N2, C2 = 13, 16
    logits2 = jax.random.normal(k3, (N2, C2), dtype=jnp.float32)
    targets2 = jax.random.randint(k4, (N2,), 0, C2, dtype=jnp.int32)
    loss2 = jax.block_until_ready(focal_loss(logits2, targets2, block_n=8))
    ref2 = _focal_loss_ref(logits2, targets2)
    assert jnp.allclose(loss2, ref2, rtol=1e-5, atol=1e-6), (loss2, ref2)

    # Case 3: bf16 inputs (sublane multiple 16) + 'sum' reduction.
    N3, C3 = 40, 16
    logits3 = jax.random.normal(k5, (N3, C3), dtype=jnp.bfloat16)
    targets3 = jax.random.randint(k6, (N3,), 0, C3, dtype=jnp.int32)
    loss3 = jax.block_until_ready(focal_loss(logits3, targets3, reduction="sum"))
    ref3 = _focal_loss_ref(logits3, targets3, reduction="sum")
    assert jnp.allclose(loss3, ref3, rtol=1e-4, atol=1e-5), (loss3, ref3)

    print("KERNEL_OK")
</pallas_src>

<mosaic_0001>
module attributes {stable_mosaic.version = 11 : i64} {
  func.func @_focal_loss_kernel(%arg0: i32, %arg1: memref<1xi32, #tpu.memory_space<smem>>, %arg2: memref<32x16xf32, #tpu.memory_space<vmem>>, %arg3: memref<32x1xi32, #tpu.memory_space<vmem>>, %arg4: memref<1x1xf32, #tpu.memory_space<smem>>) attributes {dimension_semantics = [#tpu.dimension_semantics<parallel>], iteration_bounds = array<i64: 1>, scalar_prefetch = 1 : i64, scratch_operands = 0 : i64, tpu.core_type = #tpu.core_type<tc>, window_params = [{transform_indices = @transform_0, window_bounds = array<i64: 32, 16>}, {transform_indices = @transform_1, window_bounds = array<i64: 32, 1>}, {transform_indices = @transform_2, window_bounds = array<i64: 1, 1>}]} {
    %c0 = arith.constant 0 : index
    %0 = memref.load %arg1[%c0] : memref<1xi32, #tpu.memory_space<smem>>
    %c0_0 = arith.constant 0 : index
    %c0_1 = arith.constant 0 : index
    %1 = vector.load %arg2[%c0_0, %c0_1] : memref<32x16xf32, #tpu.memory_space<vmem>>, vector<32x16xf32>
    %c0_2 = arith.constant 0 : index
    %c0_3 = arith.constant 0 : index
    %2 = vector.load %arg3[%c0_2, %c0_3] : memref<32x1xi32, #tpu.memory_space<vmem>>, vector<32x1xi32>
    %3 = tpu.iota {dimensions = array<i32: 1>} : vector<32x16xi32>
    %4 = vector.broadcast %2 : vector<32x1xi32> to vector<32x16xi32>
    %5 = arith.cmpi eq, %3, %4 : vector<32x16xi32>
    %cst = arith.constant 0.000000e+00 : f32
    %6 = vector.broadcast %cst : f32 to vector<32x16xf32>
    %7 = arith.select %5, %1, %6 : vector<32x16xi1>, vector<32x16xf32>
    %cst_4 = arith.constant dense<0.000000e+00> : vector<32xf32>
    %8 = vector.multi_reduction <add>, %7, %cst_4 [1] : vector<32x16xf32> to vector<32xf32>
    %9 = vector.shape_cast %8 : vector<32xf32> to vector<32x1xf32>
    %cst_5 = arith.constant dense<0xFF800000> : vector<32xf32>
    %10 = vector.multi_reduction <maximumf>, %1, %cst_5 [1] : vector<32x16xf32> to vector<32xf32>
    %11 = vector.shape_cast %10 : vector<32xf32> to vector<32x1xf32>
    %12 = vector.broadcast %11 : vector<32x1xf32> to vector<32x16xf32>
    %13 = arith.subf %1, %12 : vector<32x16xf32>
    %14 = math.exp %13 : vector<32x16xf32>
    %cst_6 = arith.constant dense<0.000000e+00> : vector<32xf32>
    %15 = vector.multi_reduction <add>, %14, %cst_6 [1] : vector<32x16xf32> to vector<32xf32>
    %16 = vector.shape_cast %15 : vector<32xf32> to vector<32x1xf32>
    %17 = math.log %16 : vector<32x1xf32>
    %18 = arith.addf %11, %17 : vector<32x1xf32>
    %19 = arith.subf %18, %9 : vector<32x1xf32>
    %cst_7 = arith.constant 0.000000e+00 : f32
    %20 = vector.broadcast %cst_7 : f32 to vector<32x1xf32>
    %21 = arith.subf %20, %19 : vector<32x1xf32>
    %22 = math.exp %21 : vector<32x1xf32>
    %cst_8 = arith.constant 1.000000e+00 : f32
    %23 = vector.broadcast %cst_8 : f32 to vector<32x1xf32>
    %24 = arith.subf %23, %22 : vector<32x1xf32>
    %25 = arith.mulf %24, %24 : vector<32x1xf32>
    %26 = arith.mulf %25, %19 : vector<32x1xf32>
    %27 = tpu.iota {dimensions = array<i32: 0>} : vector<32x1xi32>
    %c32_i32 = arith.constant 32 : i32
    %28 = arith.muli %arg0, %c32_i32 : i32
    %29 = vector.broadcast %28 : i32 to vector<32x1xi32>
    %30 = arith.addi %27, %29 : vector<32x1xi32>
    %31 = vector.broadcast %0 : i32 to vector<32x1xi32>
    %32 = arith.cmpi slt, %30, %31 : vector<32x1xi32>
    %cst_9 = arith.constant 0.000000e+00 : f32
    %33 = vector.broadcast %cst_9 : f32 to vector<32x1xf32>
    %34 = arith.select %32, %26, %33 : vector<32x1xi1>, vector<32x1xf32>
    %35 = vector.shape_cast %34 : vector<32x1xf32> to vector<1x32x1xf32>
    %cst_10 = arith.constant dense<0.000000e+00> : vector<1xf32>
    %36 = vector.multi_reduction <add>, %35, %cst_10 [1, 2] : vector<1x32x1xf32> to vector<1xf32>
    %37 = vector.shape_cast %36 : vector<1xf32> to vector<1x1x1xf32>
    %38 = vector.extract %37[0, 0, 0] : f32 from vector<1x1x1xf32>
    %c0_11 = arith.constant 0 : index
    %c0_12 = arith.constant 0 : index
    %39 = memref.load %arg4[%c0_11, %c0_12] : memref<1x1xf32, #tpu.memory_space<smem>>
    memref.store %38, %arg4[%c0_11, %c0_12] : memref<1x1xf32, #tpu.memory_space<smem>>
    return
  }
  func.func @transform_0(%arg0: i32, %arg1: memref<1xi32, #tpu.memory_space<smem>>) -> (i32, i32) {
    %c0_i32 = arith.constant 0 : i32
    %c0_i32_0 = arith.constant 0 : i32
    return %arg0, %c0_i32 : i32, i32
  }
  func.func @transform_1(%arg0: i32, %arg1: memref<1xi32, #tpu.memory_space<smem>>) -> (i32, i32) {
    %c0_i32 = arith.constant 0 : i32
    %c0_i32_0 = arith.constant 0 : i32
    return %arg0, %c0_i32 : i32, i32
  }
  func.func @transform_2(%arg0: i32, %arg1: memref<1xi32, #tpu.memory_space<smem>>) -> (i32, i32) {
    %c0_i32 = arith.constant 0 : i32
    %c0_i32_0 = arith.constant 0 : i32
    return %arg0, %c0_i32 : i32, i32
  }
}

</mosaic_0001>

<llo_original>
// kernel: tpu_custom_call.1
$region0: #{tpu_custom_call.1}
  #allocation0 [shape = 'u32[]', space=smem, size = 0x4, offset = 0x4, fixed_abs, tag = 'smem constant byte address 0x4 - core index']
  #allocation1 [shape = 'u32[144,128]{1,0:T(1,128)}', space=vmem, size = 0x12000, scoped, tag = 'internal scratch']
  #allocation2 [shape = 's32[1]{0}', space=sflag, size = 0x4, scoped, tag = 'scoped memory for tpu_custom_call.1']
  #allocation3 [shape = 's32[1]{0:T(128)S(6)}', space=smem, size = 0x200, scoped, tag = 'prefetched SMEM operand 0']
  %s0 = inlined_call_operand.<no memory space> [shape: s32[1], index: 0, kind: input, shape index: {}]
  %s1 = inlined_call_operand.vmem [shape: f32[32,16], index: 1, kind: input, shape index: {}]
  %s2 = inlined_call_operand.vmem [shape: s32[32,1], index: 2, kind: input, shape index: {}]
  %s3 = inlined_call_operand.hbm [shape: f32[1,1], index: 3, kind: output, shape index: {}]
  %s4 = sld [smem:[#allocation0]]
  $region18: #{tpu_custom_call.1} parent=0
    _
  %s6 = ssub.s32 1, %s4
  %s7 = scalar_select 0, %s6, %s4
  %8 = sst [smem:[#allocation3]] %s0
  $region1: #{tpu_custom_call.1} parent=0
    #allocation4 [shape = 'u8[512]{0}', space=smem, size = 0x200, scoped, tag = 'output window, operand 0, single buffered']
    #allocation5 [shape = 's32[1]{0}', space=sflag, size = 0x4, scoped, tag = 'scoped memory for tpu_custom_call.1']
    %9 = vsyncpa [#allocation5], 0
    // Predicated region
    $region2: #{tpu_custom_call.1} parent=1 // pred_check
      _
    $region3: #{tpu_custom_call.1} parent=1 // pred_check_branch
      %11 = sbr.rel (0) target = $region5
    $region4: #{tpu_custom_call.1} parent=1 // pred_region
      _
    $region5: #{tpu_custom_call.1} parent=1 // pred_fallthru
      _
    // Predicated region
    $region6: #{tpu_custom_call.1} parent=1 // pred_check
      _
    $region7: #{tpu_custom_call.1} parent=1 // pred_check_branch
      %13 = sbr.rel (0) target = $region9
    $region8: #{tpu_custom_call.1} parent=1 // pred_region
      _
    $region9: #{tpu_custom_call.1} parent=1 // pred_fallthru
      _
    %s14 = sld [smem:[#allocation3]]
    %v15 = vld [vmem:[%s1] sm:$0xff]
    %v16 = vld [vmem:[%s1 + $0x8] sm:$0xff]
    %v17 = vld [vmem:[%s1 + $0x10] sm:$0xff]
    %v18 = vld [vmem:[%s1 + $0x18] sm:$0xff]
    %v19 = vld [vmem:[%s2] sm:$0xff]
    %v20 = vld [vmem:[%s2 + $0x8] sm:$0xff]
    %v21 = vld [vmem:[%s2 + $0x10] sm:$0xff]
    %v22 = vld [vmem:[%s2 + $0x18] sm:$0xff]
    %v23 = vlaneseq
    %v24 = vand.u32 %v23, 127
    %25 = vset.pattern.permute.xlu0 0
    %26 = vperm.xlu0 %25, %v19
    %v27 = vpop.permute.xlu0 %26
    %28 = vset.pattern.permute.xlu0 0
    %29 = vperm.xlu0 %28, %v20
    %v30 = vpop.permute.xlu0 %29
    %31 = vset.pattern.permute.xlu0 0
    %32 = vperm.xlu0 %31, %v21
    %v33 = vpop.permute.xlu0 %32
    %34 = vset.pattern.permute.xlu0 0
    %35 = vperm.xlu0 %34, %v22
    %v36 = vpop.permute.xlu0 %35
    %vm37 = vcmp.eq.s32.totalorder %v24, %v27
    %vm38 = vcmp.eq.s32.totalorder %v24, %v30
    %vm39 = vcmp.eq.s32.totalorder %v24, %v33
    %vm40 = vcmp.eq.s32.totalorder %v24, %v36
    %v41 = vsel %vm37, %v15, 0.0
    %v42 = vsel %vm38, %v16, 0.0
    %v43 = vsel %vm39, %v17, 0.0
    %v44 = vsel %vm40, %v18, 0.0
    %vm45 = vcmask 130048
    %v46 = vsel %vm45, %v41, 0.0
    %47 = vadd.xlane.f32.xlu0 %v46
    %v48 = vpop.xlane.xlu0 %47
    %v49 = vsel %vm45, %v42, 0.0
    %50 = vadd.xlane.f32.xlu0 %v49
    %v51 = vpop.xlane.xlu0 %50
    %v52 = vsel %vm45, %v43, 0.0
    %53 = vadd.xlane.f32.xlu0 %v52
    %v54 = vpop.xlane.xlu0 %53
    %v55 = vsel %vm45, %v44, 0.0
    %56 = vadd.xlane.f32.xlu0 %v55
    %v57 = vpop.xlane.xlu0 %56
    %v58 = vsel %vm45, %v15, -inf
    %59 = vmax.xlane.f32.xlu0 %v58
    %v60 = vpop.xlane.xlu0 %59
    %v61 = vsel %vm45, %v16, -inf
    %62 = vmax.xlane.f32.xlu0 %v61
    %v63 = vpop.xlane.xlu0 %62
    %v64 = vsel %vm45, %v17, -inf
    %65 = vmax.xlane.f32.xlu0 %v64
    %v66 = vpop.xlane.xlu0 %65
    %v67 = vsel %vm45, %v18, -inf
    %68 = vmax.xlane.f32.xlu0 %v67
    %v69 = vpop.xlane.xlu0 %68
    %v70 = vsub.f32 %v15, %v60
    %v71 = vsub.f32 %v16, %v63
    %v72 = vsub.f32 %v17, %v66
    %v73 = vsub.f32 %v18, %v69
    %v74 = vmul.f32 %v70, 1.442695
    %v75 = vpow.pop %v74
    %v76 = vmul.f32 %v71, 1.442695
    %v77 = vpow.pop %v76
    %v78 = vmul.f32 %v72, 1.442695
    %v79 = vpow.pop %v78
    %v80 = vmul.f32 %v73, 1.442695
    %v81 = vpow.pop %v80
    %v82 = vsel %vm45, %v75, 0.0
    %83 = vadd.xlane.f32.xlu0 %v82
    %v84 = vpop.xlane.xlu0 %83
    %v85 = vsel %vm45, %v77, 0.0
    %86 = vadd.xlane.f32.xlu0 %v85
    %v87 = vpop.xlane.xlu0 %86
    %v88 = vsel %vm45, %v79, 0.0
    %89 = vadd.xlane.f32.xlu0 %v88
    %v90 = vpop.xlane.xlu0 %89
    %v91 = vsel %vm45, %v81, 0.0
    %92 = vadd.xlane.f32.xlu0 %v91
    %v93 = vpop.xlane.xlu0 %92
    %v94 = vlog2.pop %v84
    %v95 = vmul.f32 %v94, 0.6931472
    %v96 = vlog2.pop %v87
    %v97 = vmul.f32 %v96, 0.6931472
    %v98 = vlog2.pop %v90
    %v99 = vmul.f32 %v98, 0.6931472
    %v100 = vlog2.pop %v93
    %v101 = vmul.f32 %v100, 0.6931472
    %v102 = vadd.f32 %v60, %v95
    %v103 = vadd.f32 %v63, %v97
    %v104 = vadd.f32 %v66, %v99
    %v105 = vadd.f32 %v69, %v101
    %v106 = vsub.f32 %v102, %v48
    %v107 = vsub.f32 %v103, %v51
    %v108 = vsub.f32 %v104, %v54
    %v109 = vsub.f32 %v105, %v57
    %v110 = vsub.f32 0.0, %v106
    %v111 = vsub.f32 0.0, %v107
    %v112 = vsub.f32 0.0, %v108
    %v113 = vsub.f32 0.0, %v109
    %v114 = vmul.f32 %v110, 1.442695
    %v115 = vpow.pop %v114
    %v116 = vmul.f32 %v111, 1.442695
    %v117 = vpow.pop %v116
    %v118 = vmul.f32 %v112, 1.442695
    %v119 = vpow.pop %v118
    %v120 = vmul.f32 %v113, 1.442695
    %v121 = vpow.pop %v120
    %v122 = vsub.f32 1.0, %v115
    %v123 = vsub.f32 1.0, %v117
    %v124 = vsub.f32 1.0, %v119
    %v125 = vsub.f32 1.0, %v121
    %v126 = vmul.f32 %v122, %v122
    %v127 = vmul.f32 %v123, %v123
    %v128 = vmul.f32 %v124, %v124
    %v129 = vmul.f32 %v125, %v125
    %v130 = vmul.f32 %v126, %v106
    %v131 = vmul.f32 %v127, %v107
    %v132 = vmul.f32 %v128, %v108
    %v133 = vmul.f32 %v129, %v109
    %v134 = vlaneseq
    %v135 = vshrl.u32 %v134, 7
    %v136 = vadd.s32 %v135, 8
    %v137 = vadd.s32 %v135, 16
    %v138 = vadd.s32 %v135, 24
    %s139 = smul.u32 0, 32
    %v140 = vstv %s139
    %v141 = vadd.s32 %v135, %v140
    %v142 = vadd.s32 %v136, %v140
    %v143 = vadd.s32 %v137, %v140
    %v144 = vadd.s32 %v138, %v140
    %v145 = vstv %s14
    %vm146 = vcmp.lt.s32.totalorder %v141, %v145
    %vm147 = vcmp.lt.s32.totalorder %v142, %v145
    %vm148 = vcmp.lt.s32.totalorder %v143, %v145
    %vm149 = vcmp.lt.s32.totalorder %v144, %v145
    %v150 = vsel %vm146, %v130, 0.0
    %v151 = vsel %vm147, %v131, 0.0
    %v152 = vsel %vm148, %v132, 0.0
    %v153 = vsel %vm149, %v133, 0.0
    %vm154 = vcmask 7168
    %v155 = vsel %vm154, %v150, 0.0
    %v156 = vsel %vm154, %v151, 0.0
    %v157 = vadd.f32 %v155, %v156
    %v158 = vsel %vm154, %v152, 0.0
    %v159 = vadd.f32 %v157, %v158
    %v160 = vsel %vm154, %v153, 0.0
    %v161 = vadd.f32 %v159, %v160
    %162 = vadd.xlane.f32.xlu0 %v161
    %v163 = vpop.xlane.xlu0 %162
    %v164 = vrot.slane %v163, 4
    %v165 = vadd.f32 %v163, %v164
    %v166 = vrot.slane %v165, 2
    %v167 = vadd.f32 %v165, %v166
    %v168 = vrot.slane %v167, 1
    %v169 = vadd.f32 %v167, %v168
    %s170 = vtos %v169
    %s171 = scalar_lea.smem [#allocation4], 0
    %172 = sst [smem:[%s171]] %s170
    // Predicated region
    $region10: #{tpu_custom_call.1} parent=1 // pred_check
      _
    $region11: #{tpu_custom_call.1} parent=1 // pred_check_branch
      %174 = sbr.rel (0) target = $region13
    $region12: #{tpu_custom_call.1} parent=1 // pred_region
      %s176 = ssub.s32 16, 16
      %177 = vsyncadd [#allocation5], %s176
      %180 = dma.smem_to_hbm [#allocation4], 16, %s3, [#allocation5]
    $region13: #{tpu_custom_call.1} parent=1 // pred_fallthru
      _
    // Predicated region
    $region14: #{tpu_custom_call.1} parent=1 // pred_check
      _
    $region15: #{tpu_custom_call.1} parent=1 // pred_check_branch
      %182 = sbr.rel (0) target = $region17
    $region16: #{tpu_custom_call.1} parent=1 // pred_region
      %183 = dma.done [#allocation5], 16
    $region17: #{tpu_custom_call.1} parent=1 // pred_fallthru
      _
    %184 = sfence
    %185 = vsyncpa [#allocation5], 1

</llo_original>
